<compile_context>
chip_gen: v5e
topology: v5e:2x2
jax: 0.10.0
libtpu: 0.0.40
codegen_flags: <defaults>
</compile_context>

<pallas_src>
import functools

import jax
import jax.numpy as jnp
from jax.experimental import pallas as pl
from jax.experimental.pallas import tpu as pltpu


def _channel_allreduce(v, W, Cout):
    """Sum the W lane-groups of size Cout and broadcast the per-channel total
    back to every group.  v: (rows, W*Cout) f32.  Exact f32 adds; log2(W)
    pltpu.roll steps when W is a power of two (XLU, not VPU/MXU)."""
    WC = W * Cout
    if W & (W - 1) == 0:
        step = Cout
        while step < WC:
            v = v + pltpu.roll(v, shift=step, axis=1)
            step *= 2
        return v
    out = v
    for j in range(1, W):                      # general (non power-of-two) W
        out = out + pltpu.roll(v, shift=j * Cout, axis=1)
    return out


def fused_conv_bn_relu_kernel(x_ref, bw_ref, bias_ref, gamma_ref, beta_ref,
                              mask_ref, o_ref, *, W, Cout, cnt, eps):
    """Single-pass conv3x3 + bias + BatchNorm(batch stats) + ReLU.

    x_ref:    (Hs+2, W*Cin)       bf16, per-image 1-row top/bottom zero pad,
                                  images stacked along rows, +2 tail pad rows
                                  (Hs = N*(H+2)).
    bw_ref:   (KH, W*Cin, W*Cout) bf16 banded weights (horizontal pad folded in)
    bias_ref: (1, W*Cout)         f32 conv bias tiled over W (lane = w*Cout+co)
    gamma_ref/beta_ref: (1, W*Cout) f32 BN affine params tiled over W
    mask_ref: (Hs, 1)             f32 1.0 on valid rows, 0.0 on per-image seams
    o_ref:    (Hs, W*Cout)        f32 fused output (seam rows are garbage and
                                  get sliced away by the wrapper)
    """
    KH = bw_ref.shape[0]
    Hs, WC = o_ref.shape

    # ---- conv: KH banded MXU matmuls over the whole stacked batch ----------
    acc = jnp.zeros((Hs, WC), jnp.float32)
    for kh in range(KH):                       # static 3-tap unroll over rows
        lhs = x_ref[pl.ds(kh, Hs), :]          # (Hs, W*Cin) shifted ref read
        acc += jnp.dot(lhs, bw_ref[kh], preferred_element_type=jnp.float32)
    acc += bias_ref[...]                       # (1, WC) broadcast add

    # ---- BatchNorm batch statistics (seam rows masked out) -----------------
    masked = acc * mask_ref[...]
    s1 = _channel_allreduce(jnp.sum(masked, axis=0, keepdims=True), W, Cout)
    s2 = _channel_allreduce(jnp.sum(masked * masked, axis=0, keepdims=True),
                            W, Cout)
    inv_cnt = 1.0 / cnt
    mean = s1 * inv_cnt
    var = s2 * inv_cnt - mean * mean           # biased (train-mode BN)
    inv_std = jax.lax.rsqrt(var + eps)         # EUP
    scale = gamma_ref[...] * inv_std
    shift = beta_ref[...] - mean * scale

    # ---- normalize + ReLU, lane-dense writeback ----------------------------
    o_ref[...] = jnp.maximum(acc * scale + shift, 0.0)


def conv_bnorm_relu_2d(x_nchw, w_hwio, bias, gamma, beta, *, eps=1e-5):
    """Forward of ConvBNormRelu2d (NCHW in, NCHW out), k=3, s=1, p=1."""
    N, Cin, H, W = x_nchw.shape
    KH, KW, _, Cout = w_hwio.shape
    assert KH == 3 and KW == 3                 # kernel_size=3, stride=1, padding=1
    WCin, WCout = W * Cin, W * Cout
    Hp = H + 2
    Hs = N * Hp

    # --- layout: NCHW -> (N, H, W*Cin) bf16; per-image vertical zero pad;
    #     stack images along rows; +2 tail rows so every kh-shifted read is
    #     in-bounds.
    x_flat = (jnp.transpose(x_nchw, (0, 2, 3, 1))
              .reshape(N, H, WCin).astype(jnp.bfloat16))
    x_stack = jnp.pad(x_flat, ((0, 0), (1, 1), (0, 0))).reshape(Hs, WCin)
    x_stack = jnp.pad(x_stack, ((0, 2), (0, 0)))

    # --- banded weights: band[kh, p*Cin+ci, w*Cout+co] = w[kh, p-w+1, ci, co],
    #     zero outside the 3-wide band (this *is* the horizontal padding).
    p_i = jnp.arange(W)
    w_i = jnp.arange(W)
    kw_i = jnp.arange(KW)
    onehot = (p_i[None, None, :] ==
              (w_i[None, :, None] + kw_i[:, None, None] - 1)).astype(jnp.float32)
    band = jnp.einsum('kzio,zwp->kpiwo', w_hwio.astype(jnp.float32), onehot)
    band = band.reshape(KH, WCin, WCout).astype(jnp.bfloat16)

    bias_t = jnp.tile(bias.astype(jnp.float32), W).reshape(1, WCout)
    gamma_t = jnp.tile(gamma.astype(jnp.float32), W).reshape(1, WCout)
    beta_t = jnp.tile(beta.astype(jnp.float32), W).reshape(1, WCout)
    mask = ((jnp.arange(Hs) % Hp) < H).astype(jnp.float32).reshape(Hs, 1)

    kernel = functools.partial(fused_conv_bn_relu_kernel,
                               W=W, Cout=Cout, cnt=float(N * H * W),
                               eps=float(eps))

    # Single invocation, everything resident in VMEM (tiny at these shapes).
    out_stack = pl.pallas_call(
        kernel,
        out_shape=jax.ShapeDtypeStruct((Hs, WCout), jnp.float32),
    )(x_stack, band, bias_t, gamma_t, beta_t, mask)

    # Drop the per-image seam rows, NHWC(-flat) -> NCHW (fuses into one XLA copy).
    out = out_stack.reshape(N, Hp, W, Cout)[:, :H]
    return jnp.transpose(out, (0, 3, 1, 2))


def _reference(x_nchw, w_hwio, bias, gamma, beta, *, conv_dtype=jnp.float32,
               eps=1e-5):
    """Pure-JAX reference (lax conv + batch-norm + relu)."""
    x_nhwc = jnp.transpose(x_nchw, (0, 2, 3, 1)).astype(conv_dtype)
    y = jax.lax.conv_general_dilated(
        x_nhwc, w_hwio.astype(conv_dtype),
        window_strides=(1, 1), padding=((1, 1), (1, 1)),
        dimension_numbers=("NHWC", "HWIO", "NHWC"),
        preferred_element_type=jnp.float32)
    y = y + bias.reshape(1, 1, 1, -1).astype(jnp.float32)
    mean = jnp.mean(y, axis=(0, 1, 2), keepdims=True)
    var = jnp.mean((y - mean) ** 2, axis=(0, 1, 2), keepdims=True)
    y = (y - mean) * jax.lax.rsqrt(var + eps)
    y = y * gamma.reshape(1, 1, 1, -1) + beta.reshape(1, 1, 1, -1)
    y = jnp.maximum(y, 0.0)
    return jnp.transpose(y, (0, 3, 1, 2))


if __name__ == "__main__":
    key = jax.random.PRNGKey(0)
    kx, kw, kb, kg, kbe = jax.random.split(key, 5)

    N, Cin, Cout, H, W = 2, 4, 8, 16, 16
    KH = KW = 3

    x = jax.random.normal(kx, (N, Cin, H, W), jnp.float32)
    w = jax.random.normal(kw, (KH, KW, Cin, Cout), jnp.float32) * 0.1
    b = jax.random.normal(kb, (Cout,), jnp.float32) * 0.1
    gamma = 1.0 + 0.1 * jax.random.normal(kg, (Cout,), jnp.float32)
    beta = 0.1 * jax.random.normal(kbe, (Cout,), jnp.float32)

    fwd = jax.jit(conv_bnorm_relu_2d)
    out = jax.block_until_ready(fwd(x, w, b, gamma, beta))
    assert out.shape == (N, Cout, H, W)

    # Tight check vs a reference that also feeds the conv bf16 inputs
    # (mirrors the kernel's bf16 MXU feed with f32 accumulation).
    ref_bf16 = jax.block_until_ready(
        _reference(x, w, b, gamma, beta, conv_dtype=jnp.bfloat16))
    err_b = float(jnp.max(jnp.abs(out - ref_bf16)))
    assert jnp.allclose(out, ref_bf16, atol=1e-3, rtol=1e-3), err_b

    # Loose check vs the pure-f32 PyTorch-semantics reference (difference is
    # only the bf16 rounding of the conv inputs).
    ref_f32 = jax.block_until_ready(
        _reference(x, w, b, gamma, beta, conv_dtype=jnp.float32))
    err_f = float(jnp.max(jnp.abs(out - ref_f32)))
    assert jnp.allclose(out, ref_f32, atol=5e-2, rtol=5e-2), err_f

    print("KERNEL_OK")
</pallas_src>

<mosaic_0001>
module attributes {stable_mosaic.version = 11 : i64} {
  func.func @fused_conv_bn_relu_kernel(%arg0: memref<38x64xbf16, #tpu.memory_space<vmem>>, %arg1: memref<3x64x128xbf16, #tpu.memory_space<vmem>>, %arg2: memref<1x128xf32, #tpu.memory_space<vmem>>, %arg3: memref<1x128xf32, #tpu.memory_space<vmem>>, %arg4: memref<1x128xf32, #tpu.memory_space<vmem>>, %arg5: memref<36x1xf32, #tpu.memory_space<vmem>>, %arg6: memref<36x128xf32, #tpu.memory_space<vmem>>) attributes {dimension_semantics = [], scalar_prefetch = 0 : i64, scratch_operands = 0 : i64, tpu.core_type = #tpu.core_type<tc>} {
    %cst = arith.constant 0.000000e+00 : f32
    %0 = vector.broadcast %cst : f32 to vector<36x128xf32>
    %c0 = arith.constant 0 : index
    %c0_0 = arith.constant 0 : index
    %1 = vector.load %arg0[%c0, %c0_0] : memref<38x64xbf16, #tpu.memory_space<vmem>>, vector<36x64xbf16>
    %c0_1 = arith.constant 0 : index
    %c0_2 = arith.constant 0 : index
    %c0_3 = arith.constant 0 : index
    %2 = vector.load %arg1[%c0_1, %c0_2, %c0_3] : memref<3x64x128xbf16, #tpu.memory_space<vmem>>, vector<1x64x128xbf16>
    %3 = vector.shape_cast %2 : vector<1x64x128xbf16> to vector<64x128xbf16>
    %cst_4 = arith.constant dense<0.000000e+00> : vector<36x128xf32>
    %4 = tpu.matmul %1, %3, %cst_4 {dimension_numbers = #tpu.dot_dimension_numbers<[1], [0], [0], [1], [0, 0, 1, 1], [], []>} : vector<36x64xbf16>, vector<64x128xbf16>, vector<36x128xf32> -> vector<36x128xf32>
    %5 = arith.addf %0, %4 : vector<36x128xf32>
    %c1 = arith.constant 1 : index
    %c0_5 = arith.constant 0 : index
    %6 = vector.load %arg0[%c1, %c0_5] : memref<38x64xbf16, #tpu.memory_space<vmem>>, vector<36x64xbf16>
    %c1_6 = arith.constant 1 : index
    %c0_7 = arith.constant 0 : index
    %c0_8 = arith.constant 0 : index
    %7 = vector.load %arg1[%c1_6, %c0_7, %c0_8] : memref<3x64x128xbf16, #tpu.memory_space<vmem>>, vector<1x64x128xbf16>
    %8 = vector.shape_cast %7 : vector<1x64x128xbf16> to vector<64x128xbf16>
    %cst_9 = arith.constant dense<0.000000e+00> : vector<36x128xf32>
    %9 = tpu.matmul %6, %8, %cst_9 {dimension_numbers = #tpu.dot_dimension_numbers<[1], [0], [0], [1], [0, 0, 1, 1], [], []>} : vector<36x64xbf16>, vector<64x128xbf16>, vector<36x128xf32> -> vector<36x128xf32>
    %10 = arith.addf %5, %9 : vector<36x128xf32>
    %c2 = arith.constant 2 : index
    %c0_10 = arith.constant 0 : index
    %11 = vector.load %arg0[%c2, %c0_10] : memref<38x64xbf16, #tpu.memory_space<vmem>>, vector<36x64xbf16>
    %c2_11 = arith.constant 2 : index
    %c0_12 = arith.constant 0 : index
    %c0_13 = arith.constant 0 : index
    %12 = vector.load %arg1[%c2_11, %c0_12, %c0_13] : memref<3x64x128xbf16, #tpu.memory_space<vmem>>, vector<1x64x128xbf16>
    %13 = vector.shape_cast %12 : vector<1x64x128xbf16> to vector<64x128xbf16>
    %cst_14 = arith.constant dense<0.000000e+00> : vector<36x128xf32>
    %14 = tpu.matmul %11, %13, %cst_14 {dimension_numbers = #tpu.dot_dimension_numbers<[1], [0], [0], [1], [0, 0, 1, 1], [], []>} : vector<36x64xbf16>, vector<64x128xbf16>, vector<36x128xf32> -> vector<36x128xf32>
    %15 = arith.addf %10, %14 : vector<36x128xf32>
    %c0_15 = arith.constant 0 : index
    %c0_16 = arith.constant 0 : index
    %16 = vector.load %arg2[%c0_15, %c0_16] : memref<1x128xf32, #tpu.memory_space<vmem>>, vector<1x128xf32>
    %17 = vector.broadcast %16 : vector<1x128xf32> to vector<36x128xf32>
    %18 = arith.addf %15, %17 : vector<36x128xf32>
    %c0_17 = arith.constant 0 : index
    %c0_18 = arith.constant 0 : index
    %19 = vector.load %arg5[%c0_17, %c0_18] : memref<36x1xf32, #tpu.memory_space<vmem>>, vector<36x1xf32>
    %20 = vector.broadcast %19 : vector<36x1xf32> to vector<36x128xf32>
    %21 = arith.mulf %18, %20 : vector<36x128xf32>
    %cst_19 = arith.constant dense<0.000000e+00> : vector<128xf32>
    %22 = vector.multi_reduction <add>, %21, %cst_19 [0] : vector<36x128xf32> to vector<128xf32>
    %23 = vector.shape_cast %22 : vector<128xf32> to vector<1x128xf32>
    %c8_i32 = arith.constant 8 : i32
    %24 = tpu.dynamic_rotate %23 by %c8_i32 dim 1 : vector<1x128xf32>, i32 -> vector<1x128xf32>
    %25 = arith.addf %23, %24 : vector<1x128xf32>
    %c16_i32 = arith.constant 16 : i32
    %26 = tpu.dynamic_rotate %25 by %c16_i32 dim 1 : vector<1x128xf32>, i32 -> vector<1x128xf32>
    %27 = arith.addf %25, %26 : vector<1x128xf32>
    %c32_i32 = arith.constant 32 : i32
    %28 = tpu.dynamic_rotate %27 by %c32_i32 dim 1 : vector<1x128xf32>, i32 -> vector<1x128xf32>
    %29 = arith.addf %27, %28 : vector<1x128xf32>
    %c64_i32 = arith.constant 64 : i32
    %30 = tpu.dynamic_rotate %29 by %c64_i32 dim 1 : vector<1x128xf32>, i32 -> vector<1x128xf32>
    %31 = arith.addf %29, %30 : vector<1x128xf32>
    %32 = arith.mulf %21, %21 : vector<36x128xf32>
    %cst_20 = arith.constant dense<0.000000e+00> : vector<128xf32>
    %33 = vector.multi_reduction <add>, %32, %cst_20 [0] : vector<36x128xf32> to vector<128xf32>
    %34 = vector.shape_cast %33 : vector<128xf32> to vector<1x128xf32>
    %c8_i32_21 = arith.constant 8 : i32
    %35 = tpu.dynamic_rotate %34 by %c8_i32_21 dim 1 : vector<1x128xf32>, i32 -> vector<1x128xf32>
    %36 = arith.addf %34, %35 : vector<1x128xf32>
    %c16_i32_22 = arith.constant 16 : i32
    %37 = tpu.dynamic_rotate %36 by %c16_i32_22 dim 1 : vector<1x128xf32>, i32 -> vector<1x128xf32>
    %38 = arith.addf %36, %37 : vector<1x128xf32>
    %c32_i32_23 = arith.constant 32 : i32
    %39 = tpu.dynamic_rotate %38 by %c32_i32_23 dim 1 : vector<1x128xf32>, i32 -> vector<1x128xf32>
    %40 = arith.addf %38, %39 : vector<1x128xf32>
    %c64_i32_24 = arith.constant 64 : i32
    %41 = tpu.dynamic_rotate %40 by %c64_i32_24 dim 1 : vector<1x128xf32>, i32 -> vector<1x128xf32>
    %42 = arith.addf %40, %41 : vector<1x128xf32>
    %cst_25 = arith.constant 0.001953125 : f32
    %43 = vector.broadcast %cst_25 : f32 to vector<1x128xf32>
    %44 = arith.mulf %31, %43 : vector<1x128xf32>
    %cst_26 = arith.constant 0.001953125 : f32
    %45 = vector.broadcast %cst_26 : f32 to vector<1x128xf32>
    %46 = arith.mulf %42, %45 : vector<1x128xf32>
    %47 = arith.mulf %44, %44 : vector<1x128xf32>
    %48 = arith.subf %46, %47 : vector<1x128xf32>
    %cst_27 = arith.constant 9.99999974E-6 : f32
    %49 = vector.broadcast %cst_27 : f32 to vector<1x128xf32>
    %50 = arith.addf %48, %49 : vector<1x128xf32>
    %51 = math.rsqrt %50 : vector<1x128xf32>
    %c0_28 = arith.constant 0 : index
    %c0_29 = arith.constant 0 : index
    %52 = vector.load %arg3[%c0_28, %c0_29] : memref<1x128xf32, #tpu.memory_space<vmem>>, vector<1x128xf32>
    %53 = arith.mulf %52, %51 : vector<1x128xf32>
    %c0_30 = arith.constant 0 : index
    %c0_31 = arith.constant 0 : index
    %54 = vector.load %arg4[%c0_30, %c0_31] : memref<1x128xf32, #tpu.memory_space<vmem>>, vector<1x128xf32>
    %55 = arith.mulf %44, %53 : vector<1x128xf32>
    %56 = arith.subf %54, %55 : vector<1x128xf32>
    %57 = vector.broadcast %53 : vector<1x128xf32> to vector<36x128xf32>
    %58 = arith.mulf %18, %57 : vector<36x128xf32>
    %59 = vector.broadcast %56 : vector<1x128xf32> to vector<36x128xf32>
    %60 = arith.addf %58, %59 : vector<36x128xf32>
    %cst_32 = arith.constant 0.000000e+00 : f32
    %61 = vector.broadcast %cst_32 : f32 to vector<36x128xf32>
    %62 = arith.maximumf %60, %61 : vector<36x128xf32>
    %c0_33 = arith.constant 0 : index
    %c0_34 = arith.constant 0 : index
    %63 = vector.load %arg6[%c0_33, %c0_34] : memref<36x128xf32, #tpu.memory_space<vmem>>, vector<36x128xf32>
    tpu.vector_store %arg6[%c0_33, %c0_34], %62 {strides = array<i32>} : memref<36x128xf32, #tpu.memory_space<vmem>>, vector<36x128xf32>,
    return
  }
}

</mosaic_0001>

<llo_original>
// kernel: tile.18
$region0: #{tile.18}
  #allocation0 [shape = 's32[1]{0}', space=sflag, size = 0x4, scoped, tag = 'scoped memory for tile.18']
  %s0 = inlined_call_operand.vmem [shape: f32[8], index: 0, kind: input, shape index: {}]
  %s1 = inlined_call_operand.vmem [shape: f32[16,8], index: 1, kind: output, shape index: {}]
  // Predicated region
  $region2: #{tile.18} parent=0 // pred_check
    _
  $region3: #{tile.18} parent=0 // pred_check_branch
    %3 = sbr.rel (0) target = $region5
  $region4: #{tile.18} parent=0 // pred_region
    _
  $region5: #{tile.18} parent=0 // pred_fallthru
    _
  %v4 = vld [vmem:[%s0] ss:$0 sm:$0xff]
  %5 = vst [vmem:[%s1] sm:$0xff] %v4
  %s6 = scalar_lea.vmem %s1, 8
  %7 = vst [vmem:[%s6] sm:$0xff] %v4

// kernel: tile.19
$region0: #{tile.19}
  %s0 = inlined_call_operand.vmem [shape: f32[16,8], index: 0, kind: input, shape index: {}]
  %s1 = inlined_call_operand.vmem [shape: f32[1,128], index: 1, kind: output, shape index: {}]
  $region1: #{tile.19} parent=0
    #allocation0 [shape = 'u8[4096]{0}', space=vmem, size = 0x1000, scoped, tag = 'scoped mem for output reshape']
    %v2 = vld [vmem:[%s0] sm:$0x1]
    %vm3 = vcmask 64512
    %4 = vst.msk [vmem:[#allocation0] sm:$0x1] %vm3, %v2
    %s5 = scalar_lea.vmem %s0, 15
    %v6 = vld [vmem:[%s5] sm:$0x1]
    %7 = vrot.lane.b32.xlu0 %v6, 120
    %v8 = vpop.permute.xlu0 %7
    %vm9 = vcmask 1048512
    %10 = vst.msk [vmem:[#allocation0] sm:$0x1] %vm9, %v8
    %s11 = scalar_lea.vmem %s0, 14
    %v12 = vld [vmem:[%s11] sm:$0x1]
    %13 = vrot.lane.b32.xlu0 %v12, 112
    %v14 = vpop.permute.xlu0 %13
    %vm15 = vcmask 982912
    %16 = vst.msk [vmem:[#allocation0] sm:$0x1] %vm15, %v14
    %s17 = scalar_lea.vmem %s0, 13
    %v18 = vld [vmem:[%s17] sm:$0x1]
    %19 = vrot.lane.b32.xlu0 %v18, 104
    %v20 = vpop.permute.xlu0 %19
    %vm21 = vcmask 917312
    %22 = vst.msk [vmem:[#allocation0] sm:$0x1] %vm21, %v20
    %s23 = scalar_lea.vmem %s0, 12
    %v24 = vld [vmem:[%s23] sm:$0x1]
    %25 = vrot.lane.b32.xlu0 %v24, 96
    %v26 = vpop.permute.xlu0 %25
    %vm27 = vcmask 851712
    %28 = vst.msk [vmem:[#allocation0] sm:$0x1] %vm27, %v26
    %s29 = scalar_lea.vmem %s0, 11
    %v30 = vld [vmem:[%s29] sm:$0x1]
    %31 = vrot.lane.b32.xlu0 %v30, 88
    %v32 = vpop.permute.xlu0 %31
    %vm33 = vcmask 786112
    %34 = vst.msk [vmem:[#allocation0] sm:$0x1] %vm33, %v32
    %s35 = scalar_lea.vmem %s0, 10
    %v36 = vld [vmem:[%s35] sm:$0x1]
    %37 = vrot.lane.b32.xlu0 %v36, 80
    %v38 = vpop.permute.xlu0 %37
    %vm39 = vcmask 720512
    %40 = vst.msk [vmem:[#allocation0] sm:$0x1] %vm39, %v38
    %s41 = scalar_lea.vmem %s0, 9
    %v42 = vld [vmem:[%s41] sm:$0x1]
    %43 = vrot.lane.b32.xlu0 %v42, 72
    %v44 = vpop.permute.xlu0 %43
    %vm45 = vcmask 654912
    %46 = vst.msk [vmem:[#allocation0] sm:$0x1] %vm45, %v44
    %s47 = scalar_lea.vmem %s0, 8
    %v48 = vld [vmem:[%s47] sm:$0x1]
    %49 = vrot.lane.b32.xlu0 %v48, 64
    %v50 = vpop.permute.xlu0 %49
    %vm51 = vcmask 589312
    %52 = vst.msk [vmem:[#allocation0] sm:$0x1] %vm51, %v50
    %s53 = scalar_lea.vmem %s0, 7
    %v54 = vld [vmem:[%s53] sm:$0x1]
    %55 = vrot.lane.b32.xlu0 %v54, 56
    %v56 = vpop.permute.xlu0 %55
    %vm57 = vcmask 523712
    %58 = vst.msk [vmem:[#allocation0] sm:$0x1] %vm57, %v56
    %s59 = scalar_lea.vmem %s0, 6
    %v60 = vld [vmem:[%s59] sm:$0x1]
    %61 = vrot.lane.b32.xlu0 %v60, 48
    %v62 = vpop.permute.xlu0 %61
    %vm63 = vcmask 458112
    %64 = vst.msk [vmem:[#allocation0] sm:$0x1] %vm63, %v62
    %s65 = scalar_lea.vmem %s0, 5
    %v66 = vld [vmem:[%s65] sm:$0x1]
    %67 = vrot.lane.b32.xlu0 %v66, 40
    %v68 = vpop.permute.xlu0 %67
    %vm69 = vcmask 392512
    %70 = vst.msk [vmem:[#allocation0] sm:$0x1] %vm69, %v68
    %s71 = scalar_lea.vmem %s0, 4
    %v72 = vld [vmem:[%s71] sm:$0x1]
    %73 = vrot.lane.b32.xlu0 %v72, 32
    %v74 = vpop.permute.xlu0 %73
    %vm75 = vcmask 326912
    %76 = vst.msk [vmem:[#allocation0] sm:$0x1] %vm75, %v74
    %s77 = scalar_lea.vmem %s0, 3
    %v78 = vld [vmem:[%s77] sm:$0x1]
    %79 = vrot.lane.b32.xlu0 %v78, 24
    %v80 = vpop.permute.xlu0 %79
    %vm81 = vcmask 261312
    %82 = vst.msk [vmem:[#allocation0] sm:$0x1] %vm81, %v80
    %s83 = scalar_lea.vmem %s0, 2
    %v84 = vld [vmem:[%s83] sm:$0x1]
    %85 = vrot.lane.b32.xlu0 %v84, 16
    %v86 = vpop.permute.xlu0 %85
    %vm87 = vcmask 195712
    %88 = vst.msk [vmem:[#allocation0] sm:$0x1] %vm87, %v86
    %s89 = scalar_lea.vmem %s0, 1
    %v90 = vld [vmem:[%s89] sm:$0x1]
    %91 = vrot.lane.b32.xlu0 %v90, 8
    %v92 = vpop.permute.xlu0 %91
    %vm93 = vcmask 130112
    %94 = vst.msk [vmem:[#allocation0] sm:$0x1] %vm93, %v92
    %s96 = ssub.s32 2, 1
    %v97 = vld [vmem:[#allocation0] sm:%s96]
    %s99 = ssub.s32 2, 1
    %100 = vst [vmem:[%s1] sm:%s99] %v97

// kernel: conv_bnorm_relu_2d.1
$region0: #{conv_bnorm_relu_2d.1}
  #allocation0 [shape = 'u32[]', space=smem, size = 0x4, offset = 0x4, fixed_abs, tag = 'smem constant byte address 0x4 - core index']
  #allocation1 [shape = 'u32[72,128]{1,0:T(1,128)}', space=vmem, size = 0x9000, scoped, tag = 'internal scratch']
  %s0 = inlined_call_operand.vmem [shape: bf16[38,64], index: 0, kind: input, shape index: {}]
  %s1 = inlined_call_operand.vmem [shape: bf16[3,64,128], index: 1, kind: input, shape index: {}]
  %s2 = inlined_call_operand.vmem [shape: f32[1,128], index: 2, kind: input, shape index: {}]
  %s3 = inlined_call_operand.vmem [shape: f32[1,128], index: 3, kind: input, shape index: {}]
  %s4 = inlined_call_operand.vmem [shape: f32[1,128], index: 4, kind: input, shape index: {}]
  %s5 = inlined_call_operand.vmem [shape: f32[36,1], index: 5, kind: input, shape index: {}]
  %s6 = inlined_call_operand.vmem [shape: f32[36,128], index: 6, kind: output, shape index: {}]
  %s7 = sld [smem:[#allocation0]]
  $region34: #{conv_bnorm_relu_2d.1} parent=0
    _
  %s9 = ssub.s32 1, %s7
  %s10 = scalar_select 0, %s9, %s7
  // Predicated region
  $region2: #{conv_bnorm_relu_2d.1} parent=0 // pred_check
    _
  $region3: #{conv_bnorm_relu_2d.1} parent=0 // pred_check_branch
    %12 = sbr.rel (0) target = $region5
  $region4: #{conv_bnorm_relu_2d.1} parent=0 // pred_region
    _
  $region5: #{conv_bnorm_relu_2d.1} parent=0 // pred_fallthru
    _
  // Predicated region
  $region6: #{conv_bnorm_relu_2d.1} parent=0 // pred_check
    _
  $region7: #{conv_bnorm_relu_2d.1} parent=0 // pred_check_branch
    %14 = sbr.rel (0) target = $region9
  $region8: #{conv_bnorm_relu_2d.1} parent=0 // pred_region
    _
  $region9: #{conv_bnorm_relu_2d.1} parent=0 // pred_fallthru
    _
  // Predicated region
  $region10: #{conv_bnorm_relu_2d.1} parent=0 // pred_check
    _
  $region11: #{conv_bnorm_relu_2d.1} parent=0 // pred_check_branch
    %16 = sbr.rel (0) target = $region13
  $region12: #{conv_bnorm_relu_2d.1} parent=0 // pred_region
    _
  $region13: #{conv_bnorm_relu_2d.1} parent=0 // pred_fallthru
    _
  // Predicated region
  $region14: #{conv_bnorm_relu_2d.1} parent=0 // pred_check
    _
  $region15: #{conv_bnorm_relu_2d.1} parent=0 // pred_check_branch
    %18 = sbr.rel (0) target = $region17
  $region16: #{conv_bnorm_relu_2d.1} parent=0 // pred_region
    _
  $region17: #{conv_bnorm_relu_2d.1} parent=0 // pred_fallthru
    _
  // Predicated region
  $region18: #{conv_bnorm_relu_2d.1} parent=0 // pred_check
    _
  $region19: #{conv_bnorm_relu_2d.1} parent=0 // pred_check_branch
    %20 = sbr.rel (0) target = $region21
  $region20: #{conv_bnorm_relu_2d.1} parent=0 // pred_region
    _
  $region21: #{conv_bnorm_relu_2d.1} parent=0 // pred_fallthru
    _
  // Predicated region
  $region22: #{conv_bnorm_relu_2d.1} parent=0 // pred_check
    _
  $region23: #{conv_bnorm_relu_2d.1} parent=0 // pred_check_branch
    %22 = sbr.rel (0) target = $region25
  $region24: #{conv_bnorm_relu_2d.1} parent=0 // pred_region
    _
  $region25: #{conv_bnorm_relu_2d.1} parent=0 // pred_fallthru
    _
  %v24 = vld [vmem:[%s0] sm:$0xf]
  %v25 = vld [vmem:[%s0 + $0x4] sm:$0xf]
  %v26 = vld [vmem:[%s0 + $0x8] sm:$0xf]
  %v27 = vld [vmem:[%s0 + $0xc] sm:$0xf]
  %v28 = vld [vmem:[%s0 + $0x10] sm:$0x3]
  %v29 = vld [vmem:[%s1] sm:$0xf]
  %v30 = vld [vmem:[%s1 + $0x4] sm:$0xf]
  %v31 = vld [vmem:[%s1 + $0x8] sm:$0xf]
  %v32 = vld [vmem:[%s1 + $0xc] sm:$0xf]
  %v33 = vld [vmem:[%s1 + $0x10] sm:$0xf]
  %v34 = vld [vmem:[%s1 + $0x14] sm:$0xf]
  %v35 = vld [vmem:[%s1 + $0x18] sm:$0xf]
  %v36 = vld [vmem:[%s1 + $0x1c] sm:$0xf]
  %v37 = vld [vmem:[%s0 + $0x10] sm:$0x7]
  %s38 = scalar_lea.vmem %s1, 32
  %v39 = vld [vmem:[%s38] sm:$0xf]
  %v40 = vld [vmem:[%s38 + $0x4] sm:$0xf]
  %v41 = vld [vmem:[%s38 + $0x8] sm:$0xf]
  %v42 = vld [vmem:[%s38 + $0xc] sm:$0xf]
  %v43 = vld [vmem:[%s38 + $0x10] sm:$0xf]
  %v44 = vld [vmem:[%s38 + $0x14] sm:$0xf]
  %v45 = vld [vmem:[%s38 + $0x18] sm:$0xf]
  %v46 = vld [vmem:[%s38 + $0x1c] sm:$0xf]
  %v52 = vunpack.c.l.b16 %v24
  %v53 = vunpack.c.l.b16 %v25
  %v54 = vunpack.c.l.b16 %v26
  %v55 = vunpack.c.l.b16 %v27
  %v56 = vunpack.c.l.b16 %v37
  %v57 = vpack.c.b16 %v53, %v52
  %v58 = vpack.c.b16 %v55, %v54
  %v59 = vpack.c.b16 %v56, %v56
  %vm60 = vsmask.f32 7424
  %v62 = vshrl.u32 %v57, 16
  %v64 = vshll.u32 %v57, 16
  %v66 = vrot.slane %v64, 1
  %v67 = vor.u32 %v62, %v66
  %v69 = vshll.u32 %v58, 16
  %v71 = vrot.slane %v69, 1
  %v72 = vsel %vm60, %v67, %v71
  %v73 = vshrl.u32 %v58, 16
  %v75 = vor.u32 %v73, %v71
  %v77 = vshll.u32 %v59, 16
  %v79 = vrot.slane %v77, 1
  %v80 = vsel %vm60, %v75, %v79
  %v81 = vshrl.u32 %v59, 16
  %v83 = vor.u32 %v81, %v79
  %v92 = vunpack.c.l.b16 %v39
  %v93 = vunpack.c.l.b16 %v40
  %v94 = vunpack.c.l.b16 %v41
  %v95 = vunpack.c.l.b16 %v42
  %v96 = vunpack.c.l.b16 %v43
  %v97 = vunpack.c.l.b16 %v44
  %v98 = vunpack.c.l.b16 %v45
  %v99 = vunpack.c.l.b16 %v46
  %v100 = vpack.c.b16 %v93, %v92
  %v101 = vpack.c.b16 %v95, %v94
  %v102 = vpack.c.b16 %v97, %v96
  %v103 = vpack.c.b16 %v99, %v98
  %vm108 = vcmask 523264
  %v110 = vsel %vm108, %v72, 0
  %v113 = vsel %vm108, %v80, 0
  %v116 = vsel %vm108, %v83, 0
  %118 = vmatpush.bf16.msra.mxu0 0
  %119 = vmatpush.bf16.msra.mxu0 0
  %120 = vmatpush.bf16.msra.mxu0 0
  %121 = vmatpush.bf16.msra.mxu0 0
  %122 = vmatpush.bf16.msra.mxu0 %v103
  %123 = vmatpush.bf16.msra.mxu0 %v102
  %124 = vmatpush.bf16.msra.mxu0 %v101
  %125 = vmatpush.bf16.msra.mxu0 %v100
  %126 = vmatmul.bf16.gmra.mxu0 %v110
  %v127 = vpop.f32.mrf.mxu0
  %v128 = vadd.f32 0.0, %v127
  %v129 = vpop.f32.mrf.mxu0
  %v130 = vadd.f32 0.0, %v129
  %131 = vmatmul.bf16.gmra.mxu0 %v113
  %v132 = vpop.f32.mrf.mxu0
  %v133 = vadd.f32 0.0, %v132
  %v134 = vpop.f32.mrf.mxu0
  %v135 = vadd.f32 0.0, %v134
  %136 = vmatmul.bf16.gmra.mxu0 %v116
  %v137 = vpop.f32.mrf.mxu0
  %v138 = vadd.f32 0.0, %v137
  %v139 = vpop.f32.mrf.mxu0
  %140 = vdwg.mxu0
  %v142 = vunpack.c.l.b16 %v28
  %v143 = vpack.c.b16 %v142, %v142
  %v152 = vunpack.c.l.b16 %v29
  %v153 = vunpack.c.l.b16 %v30
  %v154 = vunpack.c.l.b16 %v31
  %v155 = vunpack.c.l.b16 %v32
  %v156 = vunpack.c.l.b16 %v33
  %v157 = vunpack.c.l.b16 %v34
  %v158 = vunpack.c.l.b16 %v35
  %v159 = vunpack.c.l.b16 %v36
  %v160 = vpack.c.b16 %v153, %v152
  %v161 = vpack.c.b16 %v155, %v154
  %v162 = vpack.c.b16 %v157, %v156
  %v163 = vpack.c.b16 %v159, %v158
  %v168 = vsel %vm108, %v57, 0
  %v170 = vsel %vm108, %v58, 0
  %v173 = vsel %vm108, %v143, 0
  %175 = vmatpush.bf16.msra.mxu0 0
  %176 = vmatpush.bf16.msra.mxu0 0
  %177 = vmatpush.bf16.msra.mxu0 0
  %178 = vmatpush.bf16.msra.mxu0 0
  %179 = vmatpush.bf16.msra.mxu0 %v163
  %180 = vmatpush.bf16.msra.mxu0 %v162
  %181 = vmatpush.bf16.msra.mxu0 %v161
  %182 = vmatpush.bf16.msra.mxu0 %v160
  %183 = vmatmul.bf16.gmra.mxu0 %v168
  %v184 = vpop.f32.mrf.mxu0
  %v185 = vadd.f32 %v128, %v184
  %v186 = vpop.f32.mrf.mxu0
  %v187 = vadd.f32 %v130, %v186
  %188 = vmatmul.bf16.gmra.mxu0 %v170
  %v189 = vpop.f32.mrf.mxu0
  %v190 = vadd.f32 %v133, %v189
  %v191 = vpop.f32.mrf.mxu0
  %v192 = vadd.f32 %v135, %v191
  %193 = vmatmul.bf16.gmra.mxu0 %v173
  %v194 = vpop.f32.mrf.mxu0
  %v195 = vadd.f32 %v138, %v194
  %v196 = vpop.f32.mrf.mxu0
  %197 = vdwg.mxu0
  %v198 = vld [vmem:[%s0] sm:$0xe]
  %s199 = scalar_lea.vmem %s1, 64
  %v200 = vld [vmem:[%s199] sm:$0xf]
  %v201 = vld [vmem:[%s199 + $0x4] sm:$0xf]
  %v202 = vld [vmem:[%s199 + $0x8] sm:$0xf]
  %v203 = vld [vmem:[%s199 + $0xc] sm:$0xf]
  %v204 = vld [vmem:[%s199 + $0x10] sm:$0xf]
  %v205 = vld [vmem:[%s199 + $0x14] sm:$0xf]
  %v206 = vld [vmem:[%s199 + $0x18] sm:$0xf]
  %v207 = vld [vmem:[%s199 + $0x1c] sm:$0xf]
  %v209 = vunpack.c.l.b16 %v198
  %v210 = vpack.c.b16 %v53, %v209
  %vm211 = vcmask 1046528
  %v212 = vrot.slane %v210, 1
  %v213 = vrot.slane %v58, 1
  %v214 = vsel %vm211, %v212, %v213
  %v215 = vrot.slane %v59, 1
  %v216 = vsel %vm211, %v213, %v215
  %v225 = vunpack.c.l.b16 %v200
  %v226 = vunpack.c.l.b16 %v201
  %v227 = vunpack.c.l.b16 %v202
  %v228 = vunpack.c.l.b16 %v203
  %v229 = vunpack.c.l.b16 %v204
  %v230 = vunpack.c.l.b16 %v205
  %v231 = vunpack.c.l.b16 %v206
  %v232 = vunpack.c.l.b16 %v207
  %v233 = vpack.c.b16 %v226, %v225
  %v234 = vpack.c.b16 %v228, %v227
  %v235 = vpack.c.b16 %v230, %v229
  %v236 = vpack.c.b16 %v232, %v231
  %v242 = vsel %vm108, %v214, 0
  %v245 = vsel %vm108, %v216, 0
  %v248 = vsel %vm108, %v215, 0
  %250 = vmatpush.bf16.msra.mxu0 0
  %251 = vmatpush.bf16.msra.mxu0 0
  %252 = vmatpush.bf16.msra.mxu0 0
  %253 = vmatpush.bf16.msra.mxu0 0
  %254 = vmatpush.bf16.msra.mxu0 %v236
  %255 = vmatpush.bf16.msra.mxu0 %v235
  %256 = vmatpush.bf16.msra.mxu0 %v234
  %257 = vmatpush.bf16.msra.mxu0 %v233
  %258 = vmatmul.bf16.gmra.mxu0 %v242
  %v259 = vpop.f32.mrf.mxu0
  %v260 = vadd.f32 0.0, %v259
  %v261 = vpop.f32.mrf.mxu0
  %v262 = vadd.f32 0.0, %v261
  %263 = vmatmul.bf16.gmra.mxu0 %v245
  %v264 = vpop.f32.mrf.mxu0
  %v265 = vadd.f32 0.0, %v264
  %v266 = vpop.f32.mrf.mxu0
  %v267 = vadd.f32 0.0, %v266
  %268 = vmatmul.bf16.gmra.mxu0 %v248
  %v269 = vpop.f32.mrf.mxu0
  %v270 = vadd.f32 0.0, %v269
  %v271 = vpop.f32.mrf.mxu0
  %272 = vdwg.mxu0
  %v273 = vadd.f32 %v185, %v260
  %v274 = vadd.f32 %v187, %v262
  %v275 = vadd.f32 %v190, %v265
  %v276 = vadd.f32 %v192, %v267
  %v277 = vadd.f32 %v195, %v270
  %v278 = vld [vmem:[%s2] sm:$0x1]
  %v280 = vperm.slane %v278, 0
  %v282 = vadd.f32 %v273, %v280
  %v283 = vadd.f32 %v274, %v280
  %v284 = vadd.f32 %v275, %v280
  %v285 = vadd.f32 %v276, %v280
  %v286 = vadd.f32 %v277, %v280
  %v287 = vld [vmem:[%s5] sm:$0xff]
  %v288 = vld [vmem:[%s5 + $0x8] sm:$0xff]
  %v289 = vld [vmem:[%s5 + $0x10] sm:$0xff]
  %v290 = vld [vmem:[%s5 + $0x18] sm:$0xff]
  %v291 = vld [vmem:[%s5 + $0x20] sm:$0xf]
  %293 = vset.pattern.permute.xlu0 0
  %294 = vperm.xlu0 %293, %v287
  %v295 = vpop.permute.xlu0 %294
  %298 = vset.pattern.permute.xlu0 0
  %299 = vperm.xlu0 %298, %v288
  %v300 = vpop.permute.xlu0 %299
  %303 = vset.pattern.permute.xlu0 0
  %304 = vperm.xlu0 %303, %v289
  %v305 = vpop.permute.xlu0 %304
  %308 = vset.pattern.permute.xlu0 0
  %309 = vperm.xlu0 %308, %v290
  %v310 = vpop.permute.xlu0 %309
  %313 = vset.pattern.permute.xlu0 0
  %314 = vperm.xlu0 %313, %v291
  %v315 = vpop.permute.xlu0 %314
  %v317 = vmul.f32 %v282, %v295
  %v318 = vmul.f32 %v283, %v300
  %v319 = vmul.f32 %v284, %v305
  %v320 = vmul.f32 %v285, %v310
  %v321 = vmul.f32 %v286, %v315
  %v322 = vadd.f32 %v317, %v318
  %v323 = vadd.f32 %v322, %v319
  %v324 = vadd.f32 %v323, %v320
  %vm325 = vcmask 1043456
  %v326 = vsel %vm325, %v321, 0.0
  %v327 = vadd.f32 %v324, %v326
  %v328 = vrot.slane %v327, 4
  %v329 = vadd.f32 %v327, %v328
  %v330 = vrot.slane %v329, 2
  %v331 = vadd.f32 %v329, %v330
  %v332 = vrot.slane %v331, 1
  %v333 = vadd.f32 %v331, %v332
  %334 = vrot.lane.b32.xlu0 %v333, 8
  %v335 = vpop.permute.xlu0 %334
  %v336 = vadd.f32 %v333, %v335
  %337 = vrot.lane.b32.xlu0 %v336, 16
  %v338 = vpop.permute.xlu0 %337
  %v339 = vadd.f32 %v336, %v338
  %340 = vrot.lane.b32.xlu0 %v339, 32
  %v341 = vpop.permute.xlu0 %340
  %v342 = vadd.f32 %v339, %v341
  %343 = vrot.lane.b32.xlu0 %v342, 64
  %v344 = vpop.permute.xlu0 %343
  %v345 = vadd.f32 %v342, %v344
  %v346 = vmul.f32 %v317, %v317
  %v347 = vmul.f32 %v318, %v318
  %v348 = vmul.f32 %v319, %v319
  %v349 = vmul.f32 %v320, %v320
  %v350 = vmul.f32 %v321, %v321
  %v351 = vadd.f32 %v346, %v347
  %v352 = vadd.f32 %v351, %v348
  %v353 = vadd.f32 %v352, %v349
  %v354 = vsel %vm325, %v350, 0.0
  %v355 = vadd.f32 %v353, %v354
  %v356 = vrot.slane %v355, 4
  %v357 = vadd.f32 %v355, %v356
  %v358 = vrot.slane %v357, 2
  %v359 = vadd.f32 %v357, %v358
  %v360 = vrot.slane %v359, 1
  %v361 = vadd.f32 %v359, %v360
  %362 = vrot.lane.b32.xlu0 %v361, 8
  %v363 = vpop.permute.xlu0 %362
  %v364 = vadd.f32 %v361, %v363
  %365 = vrot.lane.b32.xlu0 %v364, 16
  %v366 = vpop.permute.xlu0 %365
  %v367 = vadd.f32 %v364, %v366
  %368 = vrot.lane.b32.xlu0 %v367, 32
  %v369 = vpop.permute.xlu0 %368
  %v370 = vadd.f32 %v367, %v369
  %371 = vrot.lane.b32.xlu0 %v370, 64
  %v372 = vpop.permute.xlu0 %371
  %v373 = vadd.f32 %v370, %v372
  %v374 = vmul.f32 %v345, 0.001953125
  %v375 = vmul.f32 %v373, 0.001953125
  %v376 = vmul.f32 %v374, %v374
  %v377 = vsub.f32 %v375, %v376
  %v378 = vadd.f32 %v377, 1e-05
  %v379 = vrsqrt.pop %v378
  %v380 = vmul.f32 %v379, %v378
  %v381 = vmul.f32 %v380, %v379
  %v382 = vmul.f32 0.5, %v381
  %v383 = vsub.f32 1.5, %v382
  %v384 = vmul.f32 %v379, %v383
  %vm385 = vweird.f32 %v378
  %vm386 = vweird.f32 %v379
  %vm387 = vmor %vm385, %vm386
  %v388 = vsel %vm387, %v379, %v384
  %v389 = vld [vmem:[%s3] sm:$0x1]
  %v390 = vmul.f32 %v389, %v388
  %v391 = vld [vmem:[%s4] sm:$0x1]
  %v392 = vmul.f32 %v374, %v390
  %v393 = vsub.f32 %v391, %v392
  %v395 = vperm.slane %v390, 0
  %v397 = vmul.f32 %v282, %v395
  %v398 = vmul.f32 %v283, %v395
  %v399 = vmul.f32 %v284, %v395
  %v400 = vmul.f32 %v285, %v395
  %v401 = vmul.f32 %v286, %v395
  %v403 = vperm.slane %v393, 0
  %v405 = vadd.f32 %v397, %v403
  %v406 = vadd.f32 %v398, %v403
  %v407 = vadd.f32 %v399, %v403
  %v408 = vadd.f32 %v400, %v403
  %v409 = vadd.f32 %v401, %v403
  %v410 = vmax.f32 %v405, 0.0
  %v411 = vmax.f32 %v406, 0.0
  %v412 = vmax.f32 %v407, 0.0
  %v413 = vmax.f32 %v408, 0.0
  %v414 = vmax.f32 %v409, 0.0
  %415 = vst [vmem:[%s6] sm:$0xff] %v410
  %416 = vst [vmem:[%s6 + $0x8] sm:$0xff] %v411
  %417 = vst [vmem:[%s6 + $0x10] sm:$0xff] %v412
  %418 = vst [vmem:[%s6 + $0x18] sm:$0xff] %v413
  %419 = vst [vmem:[%s6 + $0x20] sm:$0xf] %v414
  // Predicated region
  $region26: #{conv_bnorm_relu_2d.1} parent=0 // pred_check
    _
  $region27: #{conv_bnorm_relu_2d.1} parent=0 // pred_check_branch
    %421 = sbr.rel (0) target = $region29
  $region28: #{conv_bnorm_relu_2d.1} parent=0 // pred_region
    _
  $region29: #{conv_bnorm_relu_2d.1} parent=0 // pred_fallthru
    _
  // Predicated region
  $region30: #{conv_bnorm_relu_2d.1} parent=0 // pred_check
    _
  $region31: #{conv_bnorm_relu_2d.1} parent=0 // pred_check_branch
    %423 = sbr.rel (0) target = $region33
  $region32: #{conv_bnorm_relu_2d.1} parent=0 // pred_region
    _
  $region33: #{conv_bnorm_relu_2d.1} parent=0 // pred_fallthru
    _

</llo_original>
